<compile_context>
chip_gen: v6e
topology: v6e:2x2x1
jax: 0.10.0
libtpu: 0.0.40
codegen_flags: <defaults>
</compile_context>

<pallas_src>
import functools

import jax
import jax.numpy as jnp
from jax.experimental import pallas as pl
from jax.experimental.pallas import tpu as pltpu

_LANE = 128
# Per-block (lane-padded) input budget: double-buffered (~16 MiB) plus the
# tiny (tr, 1) output stays well under the explicit VMEM limit below.
_BLOCK_BYTES_BUDGET = 8 * 1024 * 1024
_VMEM_LIMIT_BYTES = 48 * 1024 * 1024  # headroom vs v7x's 64 MiB/TC


def _round_up(x, m):
    return -(-x // m) * m


def _sublane_align(itemsize):
    # Sub-32-bit dtypes pack along sublanes: f32 -> 8, bf16 -> 16, int8/fp8 -> 32.
    packing = max(1, 4 // max(int(itemsize), 1))
    return 8 * packing


def _gap_kernel(x_ref, o_ref, *, inv_hw):
    # x_ref: (TR, HW) block, reduction axis dense on the lane dimension.
    # o_ref: (TR, 1)  block -- per-row mean, written straight from the
    #        keepdims sum (no broadcast slab, no sublane->lane relayout).
    s = jnp.sum(x_ref[...], axis=-1, keepdims=True, dtype=jnp.float32)  # (TR, 1)
    o_ref[...] = (s * inv_hw).astype(o_ref.dtype)


def _pick_row_block(rows, hw, itemsize):
    """Largest aligned row block within the byte budget; >=2 blocks when possible."""
    align = _sublane_align(itemsize)
    hw_lane_padded = _round_up(hw, _LANE)
    row_bytes = hw_lane_padded * itemsize

    tr = _BLOCK_BYTES_BUDGET // max(row_bytes, 1)
    tr = max(align, (tr // align) * align)

    # Megacore (v7x has 2 TensorCores): ensure at least two "parallel" blocks
    # whenever the row count allows an aligned split.
    if rows > align:
        tr = min(tr, _round_up(pl.cdiv(rows, 2), align))

    # Never allocate a block larger than the (aligned) row count.
    tr = min(tr, _round_up(rows, align))
    return max(tr, align)


def global_average_pool2d(x):
    """Pallas TPU implementation of F.avg_pool2d(x, kernel_size=x.shape[2:])."""
    N, C, H, W = x.shape
    rows = N * C
    hw = H * W
    itemsize = jnp.dtype(x.dtype).itemsize

    # Free, contiguous reshape: reduction axis becomes the lane-dense last dim.
    x2 = x.reshape(rows, hw)

    tr = _pick_row_block(rows, hw, itemsize)
    num_blocks = pl.cdiv(rows, tr)

    # NOTE: for extremely large spatial extents (one aligned row block bigger
    # than the VMEM budget) a second "arbitrary" grid axis over HW with a VMEM
    # accumulator would be needed; not required for NiN-scale feature maps.
    kernel = functools.partial(_gap_kernel, inv_hw=1.0 / float(hw))

    out = pl.pallas_call(
        kernel,
        out_shape=jax.ShapeDtypeStruct((rows, 1), x.dtype),
        grid_spec=pltpu.PrefetchScalarGridSpec(
            num_scalar_prefetch=0,
            grid=(num_blocks,),
            in_specs=[pl.BlockSpec((tr, hw), lambda i: (i, 0))],
            out_specs=pl.BlockSpec((tr, 1), lambda i: (i, 0)),
        ),
        compiler_params=pltpu.CompilerParams(
            dimension_semantics=("parallel",),
            vmem_limit_bytes=_VMEM_LIMIT_BYTES,
        ),
        cost_estimate=pl.CostEstimate(
            flops=rows * hw,
            transcendentals=0,
            bytes_accessed=rows * hw * itemsize + rows * itemsize,
        ),
    )(x2)

    return out.reshape(N, C, 1, 1)


if __name__ == "__main__":
    key = jax.random.PRNGKey(0)
    # Small shapes consistent with the module's forward (NCHW input).
    N, C, H, W = 2, 4, 16, 16
    x = jax.random.normal(key, (N, C, H, W), dtype=jnp.float32)

    out = global_average_pool2d(x)
    out = jax.block_until_ready(out)

    # Cross-check against plain-JAX reference (same semantics as F.avg_pool2d
    # with kernel_size == spatial dims).
    ref = jnp.mean(x, axis=(2, 3), keepdims=True)
    assert out.shape == (N, C, 1, 1), out.shape
    assert jnp.allclose(out, ref, atol=1e-5, rtol=1e-5), "mismatch vs reference"

    print("KERNEL_OK")
</pallas_src>

<mosaic_0001>
module attributes {stable_mosaic.version = 11 : i64} {
  func.func @_gap_kernel(%arg0: i32, %arg1: memref<8x256xf32, #tpu.memory_space<vmem>>, %arg2: memref<8x1xf32, #tpu.memory_space<vmem>>) attributes {dimension_semantics = [#tpu.dimension_semantics<parallel>], iteration_bounds = array<i64: 1>, scalar_prefetch = 0 : i64, scratch_operands = 0 : i64, tpu.core_type = #tpu.core_type<tc>, window_params = [{transform_indices = @transform_0, window_bounds = array<i64: 8, 256>}, {transform_indices = @transform_1, window_bounds = array<i64: 8, 1>}]} {
    %c0 = arith.constant 0 : index
    %c0_0 = arith.constant 0 : index
    %0 = vector.load %arg1[%c0, %c0_0] : memref<8x256xf32, #tpu.memory_space<vmem>>, vector<8x256xf32>
    %cst = arith.constant dense<0.000000e+00> : vector<8xf32>
    %1 = vector.multi_reduction <add>, %0, %cst [1] : vector<8x256xf32> to vector<8xf32>
    %2 = vector.shape_cast %1 : vector<8xf32> to vector<8x1xf32>
    %cst_1 = arith.constant 3.906250e-03 : f32
    %3 = vector.broadcast %cst_1 : f32 to vector<8x1xf32>
    %4 = arith.mulf %2, %3 : vector<8x1xf32>
    %c0_2 = arith.constant 0 : index
    %c0_3 = arith.constant 0 : index
    %5 = vector.load %arg2[%c0_2, %c0_3] : memref<8x1xf32, #tpu.memory_space<vmem>>, vector<8x1xf32>
    tpu.vector_store %arg2[%c0_2, %c0_3], %4 {strides = array<i32>} : memref<8x1xf32, #tpu.memory_space<vmem>>, vector<8x1xf32>,
    return
  }
  func.func @transform_0(%arg0: i32) -> (i32, i32) {
    %c0_i32 = arith.constant 0 : i32
    %c0_i32_0 = arith.constant 0 : i32
    return %arg0, %c0_i32 : i32, i32
  }
  func.func @transform_1(%arg0: i32) -> (i32, i32) {
    %c0_i32 = arith.constant 0 : i32
    %c0_i32_0 = arith.constant 0 : i32
    return %arg0, %c0_i32 : i32, i32
  }
}

</mosaic_0001>

<llo_original>
// kernel: tpu_custom_call.1
$region0: #{tpu_custom_call.1}
  #allocation0 [shape = 'u32[]', space=smem, size = 0x4, offset = 0x4, fixed_abs, tag = 'smem constant byte address 0x4 - core index']
  #allocation1 [shape = 'u32[144,128]{1,0:T(1,128)}', space=vmem, size = 0x12000, scoped, tag = 'internal scratch']
  %s0 = inlined_call_operand.hbm [shape: f32[8,256], index: 0, kind: input, shape index: {}]
  %s1 = inlined_call_operand.vmem [shape: f32[8,1], index: 1, kind: output, shape index: {}]
  %s2 = sld [smem:[#allocation0]]
  $region18: #{tpu_custom_call.1} parent=0
    _
  %s4 = ssub.s32 1, %s2
  %s5 = scalar_select 0, %s4, %s2
  $region1: #{tpu_custom_call.1} parent=0
    #allocation2 [shape = 'u8[8192]{0}', space=vmem, size = 0x2000, scoped, tag = 'input window, operand 0, single buffered']
    #allocation3 [shape = 's32[1]{0}', space=sflag, size = 0x4, scoped, tag = 'scoped memory for tpu_custom_call.1']
    %6 = vsyncpa [#allocation3], 0
    // Predicated region
    $region2: #{tpu_custom_call.1} parent=1 // pred_check
      _
    $region3: #{tpu_custom_call.1} parent=1 // pred_check_branch
      %8 = sbr.rel (0) target = $region5
    $region4: #{tpu_custom_call.1} parent=1 // pred_region
      %s10 = ssub.s32 256, 256
      %11 = vsyncadd [#allocation3], %s10
      %s13 = sshll.u32 [#allocation2], 4
      %s14 = int_to_ptr.vmem [resolvable:$true] %s13
      %16 = dma.hbm_to_vmem [thread:$0]  %s0, 256, %s14, [#allocation3]
    $region5: #{tpu_custom_call.1} parent=1 // pred_fallthru
      _
    // Predicated region
    $region6: #{tpu_custom_call.1} parent=1 // pred_check
      _
    $region7: #{tpu_custom_call.1} parent=1 // pred_check_branch
      %18 = sbr.rel (0) target = $region9
    $region8: #{tpu_custom_call.1} parent=1 // pred_region
      %19 = dma.done [#allocation3], 256
    $region9: #{tpu_custom_call.1} parent=1 // pred_fallthru
      _
    %v20 = vld [vmem:[#allocation2] sm:$0xff]
    %v21 = vld [vmem:[#allocation2 + $0x8] sm:$0xff]
    %v22 = vadd.f32 %v20, %v21
    %23 = vadd.xlane.f32.xlu0 %v22
    %v24 = vpop.xlane.xlu0 %23
    %v25 = vmul.f32 %v24, 0.00390625
    %vm26 = vcmask 7168
    %27 = vst.msk [vmem:[%s1] sm:$0xff] %vm26, %v25
    // Predicated region
    $region10: #{tpu_custom_call.1} parent=1 // pred_check
      _
    $region11: #{tpu_custom_call.1} parent=1 // pred_check_branch
      %29 = sbr.rel (0) target = $region13
    $region12: #{tpu_custom_call.1} parent=1 // pred_region
      _
    $region13: #{tpu_custom_call.1} parent=1 // pred_fallthru
      _
    // Predicated region
    $region14: #{tpu_custom_call.1} parent=1 // pred_check
      _
    $region15: #{tpu_custom_call.1} parent=1 // pred_check_branch
      %31 = sbr.rel (0) target = $region17
    $region16: #{tpu_custom_call.1} parent=1 // pred_region
      _
    $region17: #{tpu_custom_call.1} parent=1 // pred_fallthru
      _
    %32 = vsyncpa [#allocation3], 1

</llo_original>
